<compile_context>
chip_gen: v6e
topology: v6e:2x2x1
jax: 0.10.0
libtpu: 0.0.40
codegen_flags: <defaults>
</compile_context>

<pallas_src>
import functools

import jax
import jax.numpy as jnp
from jax import lax
from jax.experimental import pallas as pl
from jax.experimental.pallas import tpu as pltpu

EPS_IN = 1e-3                      # nn.InstanceNorm2d(eps=0.001)
EPS_BN = 1e-5                      # nn.BatchNorm2d default eps
_VMEM_LIMIT = 32 * 1024 * 1024     # explicit scoped-VMEM limit, safe on v5e/v6e/v7x


def _pick_tb(batch, channels, points):
    """Largest divisor of `batch` whose (TB, C, N) f32 block stays <= ~2 MiB."""
    bytes_per_sample = max(channels * points * 4, 1)
    cap = max(1, (2 * 1024 * 1024) // bytes_per_sample)
    cap = min(cap, batch, 32)
    for tb in range(cap, 0, -1):
        if batch % tb == 0:
            return tb
    return 1


# --------------------------------------------------------------------------
# Pass 1: accumulate E[y^2] = var / (var + EPS_IN) per channel over the batch
# (y = instance-normalised x; E[y] == 0 analytically, so this is the BN var).
# --------------------------------------------------------------------------
def _bn_stats_kernel(x_ref, var_ref, *, tb, inv_b):
    @pl.when(pl.program_id(1) == 0)
    def _():
        var_ref[...] = jnp.zeros_like(var_ref)

    inv_n = 1.0 / x_ref.shape[-1]
    c_blk = x_ref.shape[1]

    def body(t, acc):
        x = x_ref[t]                                            # (C_blk, N)
        s1 = jnp.sum(x, axis=-1, keepdims=True)                 # sum(x)
        s2 = jnp.sum(x * x, axis=-1, keepdims=True)             # sum(x^2)
        mu = s1 * inv_n
        var = jnp.maximum(s2 * inv_n - mu * mu, 0.0)            # biased var
        return acc + var / (var + EPS_IN)                       # == E_n[y^2]

    acc = lax.fori_loop(0, tb, body, jnp.zeros((c_blk, 1), jnp.float32),
                        unroll=min(tb, 8))
    var_ref[...] += acc * inv_b


# --------------------------------------------------------------------------
# Pass 2: fused IN + folded-BN + ReLU + 1x1 conv (MXU) + softmax(N) + pooling.
# TB samples per grid step; N stays on lanes for every intermediate; the
# output is written as (K, C) so the store is lane-dense in C.
# --------------------------------------------------------------------------
def _diff_pool_kernel(x_ref, scale_ref, shift_ref, w_ref, out_ref, *, tb):
    scale = scale_ref[...]            # (C, 1) = gamma * rsqrt(bn_var + EPS_BN)
    shift = shift_ref[...]            # (C, 1) = beta  (bn_mean == 0 analytically)
    w = w_ref[...]                    # (K, C) 1x1 conv weight
    inv_n = 1.0 / x_ref.shape[-1]

    def body(t, carry):
        x = x_ref[t]                                            # (C, N)
        s1 = jnp.sum(x, axis=-1, keepdims=True)
        s2 = jnp.sum(x * x, axis=-1, keepdims=True)
        mu = s1 * inv_n
        var = jnp.maximum(s2 * inv_n - mu * mu, 0.0)
        a = lax.rsqrt(var + EPS_IN) * scale                     # fused IN*BN scale
        z = jnp.maximum((x - mu) * a + shift, 0.0)              # IN+BN+ReLU (C, N)
        # 1x1 conv == (K, C) @ (C, N) on the MXU.  Conv bias dropped: a per-K
        # constant is a no-op through the softmax over N.
        embed = lax.dot_general(w, z, (((1,), (0,)), ((), ())),
                                preferred_element_type=jnp.float32)    # (K, N)
        m = jnp.max(embed, axis=-1, keepdims=True)
        e = jnp.exp(embed - m)                                  # unnormalised softmax
        sum_e = jnp.sum(e, axis=-1, keepdims=True)              # (K, 1)
        # Pooling: (K, C) = E @ x^T, contracting the two lane (N) axes; the
        # softmax normalisation is applied after the matmul (K*C scales).
        out_kc = lax.dot_general(e, x, (((1,), (1,)), ((), ())),
                                 preferred_element_type=jnp.float32)   # (K, C)
        out_kc = out_kc * pl.reciprocal(sum_e, approx=False)
        out_ref[t] = out_kc.astype(out_ref.dtype)
        return carry

    lax.fori_loop(0, tb, body, 0, unroll=min(tb, 8))


@jax.jit
def diff_pool_pallas(x4, conv_w, conv_b, bn_gamma, bn_beta):
    """diff_pool forward: x4 (B, C, N, 1) -> (B, C, K, 1)."""
    del conv_b  # per-K constant -> no effect through softmax over dim=2
    B, C, N, _ = x4.shape
    K = conv_w.shape[0]
    x = x4.reshape(B, C, N).astype(jnp.float32)
    w = conv_w.reshape(K, C).astype(jnp.float32)
    gamma = bn_gamma.reshape(C, 1).astype(jnp.float32)
    beta = bn_beta.reshape(C, 1).astype(jnp.float32)

    tb = _pick_tb(B, C, N)
    nb = B // tb
    nc = 2 if (C % 16 == 0) else 1        # channel split -> both TCs on v7x
    c_blk = C // nc
    itemsize = 4

    # ---- Pass 1: batch-wide BN variance of the instance-normalised input.
    bn_var = pl.pallas_call(
        functools.partial(_bn_stats_kernel, tb=tb, inv_b=1.0 / float(B)),
        out_shape=jax.ShapeDtypeStruct((C, 1), jnp.float32),
        grid=(nc, nb),
        in_specs=[pl.BlockSpec((tb, c_blk, N), lambda ci, bi: (bi, ci, 0))],
        out_specs=pl.BlockSpec((c_blk, 1), lambda ci, bi: (ci, 0)),
        compiler_params=pltpu.CompilerParams(
            dimension_semantics=("parallel", "arbitrary"),
            vmem_limit_bytes=_VMEM_LIMIT),
        cost_estimate=pl.CostEstimate(
            flops=3 * B * C * N + 8 * B * C,
            transcendentals=B * C,
            bytes_accessed=itemsize * (B * C * N + C)),
    )(x)

    # Fold BatchNorm (training-mode batch stats) into one per-channel
    # scale/shift computed once for all B.  bn_mean == 0 analytically.
    scale = gamma * lax.rsqrt(jnp.maximum(bn_var, 0.0) + EPS_BN)
    shift = beta

    # ---- Pass 2: fused norm + conv + softmax + pooling matmul.
    out_kc = pl.pallas_call(
        functools.partial(_diff_pool_kernel, tb=tb),
        out_shape=jax.ShapeDtypeStruct((B, K, C), jnp.float32),
        grid=(nb,),
        in_specs=[pl.BlockSpec((tb, C, N), lambda bi: (bi, 0, 0)),
                  pl.BlockSpec((C, 1), lambda bi: (0, 0)),
                  pl.BlockSpec((C, 1), lambda bi: (0, 0)),
                  pl.BlockSpec((K, C), lambda bi: (0, 0))],
        out_specs=pl.BlockSpec((tb, K, C), lambda bi: (bi, 0, 0)),
        compiler_params=pltpu.CompilerParams(
            dimension_semantics=("parallel",),
            vmem_limit_bytes=_VMEM_LIMIT),
        cost_estimate=pl.CostEstimate(
            flops=B * (4 * K * C * N + 7 * C * N + 3 * K * N + 2 * K * C),
            transcendentals=B * (K * N + C),
            bytes_accessed=itemsize * (B * C * N + B * K * C + K * C + 2 * C)),
    )(x, scale, shift, w)

    # (B, K, C) -> (B, C, K, 1): the in-kernel store stayed lane-dense in C;
    # the small transpose happens here in the wrapper.
    return jnp.transpose(out_kc, (0, 2, 1))[..., None]


# --------------------------------------------------------------------------
# Pure-JAX reference of the same forward semantics (full, no shortcuts).
# --------------------------------------------------------------------------
def diff_pool_ref(x4, conv_w, conv_b, bn_gamma, bn_beta):
    B, C, N, _ = x4.shape
    K = conv_w.shape[0]
    x = x4[..., 0]                                            # (B, C, N)
    mu = x.mean(axis=-1, keepdims=True)
    var = ((x - mu) ** 2).mean(axis=-1, keepdims=True)
    y = (x - mu) / jnp.sqrt(var + EPS_IN)                     # InstanceNorm2d
    bn_mu = y.mean(axis=(0, 2), keepdims=True)
    bn_var = ((y - bn_mu) ** 2).mean(axis=(0, 2), keepdims=True)
    z = (y - bn_mu) / jnp.sqrt(bn_var + EPS_BN)               # BatchNorm2d (train)
    z = z * bn_gamma[None, :, None] + bn_beta[None, :, None]
    z = jnp.maximum(z, 0.0)                                   # ReLU
    w = conv_w.reshape(K, C)
    embed = jnp.einsum("kc,bcn->bkn", w, z,
                       precision=lax.Precision.HIGHEST) + conv_b[None, :, None]
    S = jax.nn.softmax(embed, axis=-1)                        # softmax over dim=2
    out = jnp.einsum("bcn,bkn->bck", x, S,
                     precision=lax.Precision.HIGHEST)
    return out[..., None]                                     # (B, C, K, 1)


if __name__ == "__main__":
    # in_channel=4, output_points=8, batch=2, 16 points (x shape (B, C, N, 1)).
    B, C, N, K = 2, 4, 16, 8
    key = jax.random.PRNGKey(0)
    kx, kw, kb = jax.random.split(key, 3)
    x = jax.random.normal(kx, (B, C, N, 1), dtype=jnp.float32)
    conv_w = jax.random.normal(kw, (K, C, 1, 1), dtype=jnp.float32) / jnp.sqrt(C)
    conv_b = 0.1 * jax.random.normal(kb, (K,), dtype=jnp.float32)
    bn_gamma = jnp.ones((C,), jnp.float32)    # BatchNorm2d affine defaults
    bn_beta = jnp.zeros((C,), jnp.float32)

    out = diff_pool_pallas(x, conv_w, conv_b, bn_gamma, bn_beta)
    out = jax.block_until_ready(out)

    ref = diff_pool_ref(x, conv_w, conv_b, bn_gamma, bn_beta)
    assert out.shape == (B, C, K, 1), out.shape
    err = float(jnp.max(jnp.abs(out - ref)))
    assert err < 5e-4, f"mismatch vs reference, max abs err = {err}"
    print("KERNEL_OK")
</pallas_src>

<mosaic_0001>
module attributes {stable_mosaic.version = 11 : i64} {
  func.func @_bn_stats_kernel(%arg0: i32, %arg1: i32, %arg2: memref<2x4x16xf32, #tpu.memory_space<vmem>>, %arg3: memref<4x1xf32, #tpu.memory_space<vmem>>) attributes {dimension_semantics = [#tpu.dimension_semantics<parallel>, #tpu.dimension_semantics<arbitrary>], iteration_bounds = array<i64: 1, 1>, scalar_prefetch = 0 : i64, scratch_operands = 0 : i64, tpu.core_type = #tpu.core_type<tc>, window_params = [{transform_indices = @transform_0, window_bounds = array<i64: 2, 4, 16>}, {transform_indices = @transform_1, window_bounds = array<i64: 4, 1>}]} {
    %c0_i32 = arith.constant 0 : i32
    %0 = arith.cmpi eq, %arg1, %c0_i32 : i32
    %1 = arith.extui %0 : i1 to i32
    %c0_i32_0 = arith.constant 0 : i32
    %2 = arith.cmpi ne, %1, %c0_i32_0 : i32
    scf.if %2 {
      %cst_22 = arith.constant 0.000000e+00 : f32
      %49 = vector.broadcast %cst_22 : f32 to vector<4x1xf32>
      %c0_23 = arith.constant 0 : index
      %c0_24 = arith.constant 0 : index
      %50 = vector.load %arg3[%c0_23, %c0_24] : memref<4x1xf32, #tpu.memory_space<vmem>>, vector<4x1xf32>
      tpu.vector_store %arg3[%c0_23, %c0_24], %49 {strides = array<i32>} : memref<4x1xf32, #tpu.memory_space<vmem>>, vector<4x1xf32>,
    } else {
    }
    %cst = arith.constant 0.000000e+00 : f32
    %3 = vector.broadcast %cst : f32 to vector<4x1xf32>
    %c0_i32_1 = arith.constant 0 : i32
    %4 = arith.index_cast %c0_i32_1 : i32 to index
    %c0 = arith.constant 0 : index
    %c0_2 = arith.constant 0 : index
    %5 = vector.load %arg2[%4, %c0, %c0_2] : memref<2x4x16xf32, #tpu.memory_space<vmem>>, vector<1x4x16xf32>
    %6 = vector.shape_cast %5 : vector<1x4x16xf32> to vector<4x16xf32>
    %cst_3 = arith.constant dense<0.000000e+00> : vector<4xf32>
    %7 = vector.multi_reduction <add>, %6, %cst_3 [1] : vector<4x16xf32> to vector<4xf32>
    %8 = vector.shape_cast %7 : vector<4xf32> to vector<4x1xf32>
    %9 = arith.mulf %6, %6 : vector<4x16xf32>
    %cst_4 = arith.constant dense<0.000000e+00> : vector<4xf32>
    %10 = vector.multi_reduction <add>, %9, %cst_4 [1] : vector<4x16xf32> to vector<4xf32>
    %11 = vector.shape_cast %10 : vector<4xf32> to vector<4x1xf32>
    %cst_5 = arith.constant 6.250000e-02 : f32
    %12 = vector.broadcast %cst_5 : f32 to vector<4x1xf32>
    %13 = arith.mulf %8, %12 : vector<4x1xf32>
    %cst_6 = arith.constant 6.250000e-02 : f32
    %14 = vector.broadcast %cst_6 : f32 to vector<4x1xf32>
    %15 = arith.mulf %11, %14 : vector<4x1xf32>
    %16 = arith.mulf %13, %13 : vector<4x1xf32>
    %17 = arith.subf %15, %16 : vector<4x1xf32>
    %cst_7 = arith.constant 0.000000e+00 : f32
    %18 = vector.broadcast %cst_7 : f32 to vector<4x1xf32>
    %19 = arith.maximumf %17, %18 : vector<4x1xf32>
    %cst_8 = arith.constant 1.000000e-03 : f32
    %20 = vector.broadcast %cst_8 : f32 to vector<4x1xf32>
    %21 = arith.addf %19, %20 : vector<4x1xf32>
    %22 = arith.divf %19, %21 : vector<4x1xf32>
    %23 = arith.addf %3, %22 : vector<4x1xf32>
    %c1_i32 = arith.constant 1 : i32
    %24 = arith.index_cast %c1_i32 : i32 to index
    %c0_9 = arith.constant 0 : index
    %c0_10 = arith.constant 0 : index
    %25 = vector.load %arg2[%24, %c0_9, %c0_10] : memref<2x4x16xf32, #tpu.memory_space<vmem>>, vector<1x4x16xf32>
    %26 = vector.shape_cast %25 : vector<1x4x16xf32> to vector<4x16xf32>
    %cst_11 = arith.constant dense<0.000000e+00> : vector<4xf32>
    %27 = vector.multi_reduction <add>, %26, %cst_11 [1] : vector<4x16xf32> to vector<4xf32>
    %28 = vector.shape_cast %27 : vector<4xf32> to vector<4x1xf32>
    %29 = arith.mulf %26, %26 : vector<4x16xf32>
    %cst_12 = arith.constant dense<0.000000e+00> : vector<4xf32>
    %30 = vector.multi_reduction <add>, %29, %cst_12 [1] : vector<4x16xf32> to vector<4xf32>
    %31 = vector.shape_cast %30 : vector<4xf32> to vector<4x1xf32>
    %cst_13 = arith.constant 6.250000e-02 : f32
    %32 = vector.broadcast %cst_13 : f32 to vector<4x1xf32>
    %33 = arith.mulf %28, %32 : vector<4x1xf32>
    %cst_14 = arith.constant 6.250000e-02 : f32
    %34 = vector.broadcast %cst_14 : f32 to vector<4x1xf32>
    %35 = arith.mulf %31, %34 : vector<4x1xf32>
    %36 = arith.mulf %33, %33 : vector<4x1xf32>
    %37 = arith.subf %35, %36 : vector<4x1xf32>
    %cst_15 = arith.constant 0.000000e+00 : f32
    %38 = vector.broadcast %cst_15 : f32 to vector<4x1xf32>
    %39 = arith.maximumf %37, %38 : vector<4x1xf32>
    %cst_16 = arith.constant 1.000000e-03 : f32
    %40 = vector.broadcast %cst_16 : f32 to vector<4x1xf32>
    %41 = arith.addf %39, %40 : vector<4x1xf32>
    %42 = arith.divf %39, %41 : vector<4x1xf32>
    %43 = arith.addf %23, %42 : vector<4x1xf32>
    %c2_i32 = arith.constant 2 : i32
    %c0_17 = arith.constant 0 : index
    %c0_18 = arith.constant 0 : index
    %44 = vector.load %arg3[%c0_17, %c0_18] : memref<4x1xf32, #tpu.memory_space<vmem>>, vector<4x1xf32>
    %cst_19 = arith.constant 5.000000e-01 : f32
    %45 = vector.broadcast %cst_19 : f32 to vector<4x1xf32>
    %46 = arith.mulf %43, %45 : vector<4x1xf32>
    %47 = arith.addf %44, %46 : vector<4x1xf32>
    %c0_20 = arith.constant 0 : index
    %c0_21 = arith.constant 0 : index
    %48 = vector.load %arg3[%c0_20, %c0_21] : memref<4x1xf32, #tpu.memory_space<vmem>>, vector<4x1xf32>
    tpu.vector_store %arg3[%c0_20, %c0_21], %47 {strides = array<i32>} : memref<4x1xf32, #tpu.memory_space<vmem>>, vector<4x1xf32>,
    return
  }
  func.func @transform_0(%arg0: i32, %arg1: i32) -> (i32, i32, i32) {
    %c0_i32 = arith.constant 0 : i32
    %c0_i32_0 = arith.constant 0 : i32
    return %arg1, %arg0, %c0_i32 : i32, i32, i32
  }
  func.func @transform_1(%arg0: i32, %arg1: i32) -> (i32, i32) {
    %c0_i32 = arith.constant 0 : i32
    %c0_i32_0 = arith.constant 0 : i32
    return %arg0, %c0_i32 : i32, i32
  }
}

module attributes {stable_mosaic.version = 11 : i64} {
  func.func @_diff_pool_kernel(%arg0: i32, %arg1: memref<2x4x16xf32, #tpu.memory_space<vmem>>, %arg2: memref<4x1xf32, #tpu.memory_space<vmem>>, %arg3: memref<4x1xf32, #tpu.memory_space<vmem>>, %arg4: memref<8x4xf32, #tpu.memory_space<vmem>>, %arg5: memref<2x8x4xf32, #tpu.memory_space<vmem>>) attributes {dimension_semantics = [#tpu.dimension_semantics<parallel>], iteration_bounds = array<i64: 1>, scalar_prefetch = 0 : i64, scratch_operands = 0 : i64, tpu.core_type = #tpu.core_type<tc>, window_params = [{transform_indices = @transform_0, window_bounds = array<i64: 2, 4, 16>}, {pipeline_mode = #tpu.pipeline_mode<synchronous>, transform_indices = @transform_1, window_bounds = array<i64: 4, 1>}, {pipeline_mode = #tpu.pipeline_mode<synchronous>, transform_indices = @transform_2, window_bounds = array<i64: 4, 1>}, {pipeline_mode = #tpu.pipeline_mode<synchronous>, transform_indices = @transform_3, window_bounds = array<i64: 8, 4>}, {transform_indices = @transform_4, window_bounds = array<i64: 2, 8, 4>}]} {
    %c0 = arith.constant 0 : index
    %c0_0 = arith.constant 0 : index
    %0 = vector.load %arg2[%c0, %c0_0] : memref<4x1xf32, #tpu.memory_space<vmem>>, vector<4x1xf32>
    %c0_1 = arith.constant 0 : index
    %c0_2 = arith.constant 0 : index
    %1 = vector.load %arg3[%c0_1, %c0_2] : memref<4x1xf32, #tpu.memory_space<vmem>>, vector<4x1xf32>
    %c0_3 = arith.constant 0 : index
    %c0_4 = arith.constant 0 : index
    %2 = vector.load %arg4[%c0_3, %c0_4] : memref<8x4xf32, #tpu.memory_space<vmem>>, vector<8x4xf32>
    %c0_i32 = arith.constant 0 : i32
    %3 = arith.index_cast %c0_i32 : i32 to index
    %c0_5 = arith.constant 0 : index
    %c0_6 = arith.constant 0 : index
    %4 = vector.load %arg1[%3, %c0_5, %c0_6] : memref<2x4x16xf32, #tpu.memory_space<vmem>>, vector<1x4x16xf32>
    %5 = vector.shape_cast %4 : vector<1x4x16xf32> to vector<4x16xf32>
    %cst = arith.constant dense<0.000000e+00> : vector<4xf32>
    %6 = vector.multi_reduction <add>, %5, %cst [1] : vector<4x16xf32> to vector<4xf32>
    %7 = vector.shape_cast %6 : vector<4xf32> to vector<4x1xf32>
    %8 = arith.mulf %5, %5 : vector<4x16xf32>
    %cst_7 = arith.constant dense<0.000000e+00> : vector<4xf32>
    %9 = vector.multi_reduction <add>, %8, %cst_7 [1] : vector<4x16xf32> to vector<4xf32>
    %10 = vector.shape_cast %9 : vector<4xf32> to vector<4x1xf32>
    %cst_8 = arith.constant 6.250000e-02 : f32
    %11 = vector.broadcast %cst_8 : f32 to vector<4x1xf32>
    %12 = arith.mulf %7, %11 : vector<4x1xf32>
    %cst_9 = arith.constant 6.250000e-02 : f32
    %13 = vector.broadcast %cst_9 : f32 to vector<4x1xf32>
    %14 = arith.mulf %10, %13 : vector<4x1xf32>
    %15 = arith.mulf %12, %12 : vector<4x1xf32>
    %16 = arith.subf %14, %15 : vector<4x1xf32>
    %cst_10 = arith.constant 0.000000e+00 : f32
    %17 = vector.broadcast %cst_10 : f32 to vector<4x1xf32>
    %18 = arith.maximumf %16, %17 : vector<4x1xf32>
    %cst_11 = arith.constant 1.000000e-03 : f32
    %19 = vector.broadcast %cst_11 : f32 to vector<4x1xf32>
    %20 = arith.addf %18, %19 : vector<4x1xf32>
    %21 = math.rsqrt %20 : vector<4x1xf32>
    %22 = arith.mulf %21, %0 : vector<4x1xf32>
    %23 = vector.broadcast %12 : vector<4x1xf32> to vector<4x16xf32>
    %24 = arith.subf %5, %23 : vector<4x16xf32>
    %25 = vector.broadcast %22 : vector<4x1xf32> to vector<4x16xf32>
    %26 = arith.mulf %24, %25 : vector<4x16xf32>
    %27 = vector.broadcast %1 : vector<4x1xf32> to vector<4x16xf32>
    %28 = arith.addf %26, %27 : vector<4x16xf32>
    %cst_12 = arith.constant 0.000000e+00 : f32
    %29 = vector.broadcast %cst_12 : f32 to vector<4x16xf32>
    %30 = arith.maximumf %28, %29 : vector<4x16xf32>
    %cst_13 = arith.constant dense<0.000000e+00> : vector<8x16xf32>
    %31 = tpu.matmul %2, %30, %cst_13 {dimension_numbers = #tpu.dot_dimension_numbers<[1], [0], [0], [1], [0, 0, 1, 1], [], []>} : vector<8x4xf32>, vector<4x16xf32>, vector<8x16xf32> -> vector<8x16xf32>
    %cst_14 = arith.constant dense<0xFF800000> : vector<8xf32>
    %32 = vector.multi_reduction <maximumf>, %31, %cst_14 [1] : vector<8x16xf32> to vector<8xf32>
    %33 = vector.shape_cast %32 : vector<8xf32> to vector<8x1xf32>
    %34 = vector.broadcast %33 : vector<8x1xf32> to vector<8x16xf32>
    %35 = arith.subf %31, %34 : vector<8x16xf32>
    %36 = math.exp %35 : vector<8x16xf32>
    %cst_15 = arith.constant dense<0.000000e+00> : vector<8xf32>
    %37 = vector.multi_reduction <add>, %36, %cst_15 [1] : vector<8x16xf32> to vector<8xf32>
    %38 = vector.shape_cast %37 : vector<8xf32> to vector<8x1xf32>
    %cst_16 = arith.constant dense<0.000000e+00> : vector<8x4xf32>
    %39 = tpu.matmul %36, %5, %cst_16 {dimension_numbers = #tpu.dot_dimension_numbers<[1], [1], [0], [0], [0, 0, 1, 0], [], []>} : vector<8x16xf32>, vector<4x16xf32>, vector<8x4xf32> -> vector<8x4xf32>
    %40 = tpu.reciprocal %38 : vector<8x1xf32> -> vector<8x1xf32>
    %41 = vector.broadcast %40 : vector<8x1xf32> to vector<8x4xf32>
    %42 = arith.mulf %39, %41 : vector<8x4xf32>
    %43 = arith.index_cast %c0_i32 : i32 to index
    %c0_17 = arith.constant 0 : index
    %c0_18 = arith.constant 0 : index
    %44 = vector.load %arg5[%43, %c0_17, %c0_18] : memref<2x8x4xf32, #tpu.memory_space<vmem>>, vector<1x8x4xf32>
    %45 = vector.shape_cast %44 : vector<1x8x4xf32> to vector<8x4xf32>
    %46 = vector.shape_cast %42 : vector<8x4xf32> to vector<1x8x4xf32>
    tpu.vector_store %arg5[%43, %c0_17, %c0_18], %46 {strides = array<i32>} : memref<2x8x4xf32, #tpu.memory_space<vmem>>, vector<1x8x4xf32>,
    %c1_i32 = arith.constant 1 : i32
    %47 = arith.index_cast %c1_i32 : i32 to index
    %c0_19 = arith.constant 0 : index
    %c0_20 = arith.constant 0 : index
    %48 = vector.load %arg1[%47, %c0_19, %c0_20] : memref<2x4x16xf32, #tpu.memory_space<vmem>>, vector<1x4x16xf32>
    %49 = vector.shape_cast %48 : vector<1x4x16xf32> to vector<4x16xf32>
    %cst_21 = arith.constant dense<0.000000e+00> : vector<4xf32>
    %50 = vector.multi_reduction <add>, %49, %cst_21 [1] : vector<4x16xf32> to vector<4xf32>
    %51 = vector.shape_cast %50 : vector<4xf32> to vector<4x1xf32>
    %52 = arith.mulf %49, %49 : vector<4x16xf32>
    %cst_22 = arith.constant dense<0.000000e+00> : vector<4xf32>
    %53 = vector.multi_reduction <add>, %52, %cst_22 [1] : vector<4x16xf32> to vector<4xf32>
    %54 = vector.shape_cast %53 : vector<4xf32> to vector<4x1xf32>
    %cst_23 = arith.constant 6.250000e-02 : f32
    %55 = vector.broadcast %cst_23 : f32 to vector<4x1xf32>
    %56 = arith.mulf %51, %55 : vector<4x1xf32>
    %cst_24 = arith.constant 6.250000e-02 : f32
    %57 = vector.broadcast %cst_24 : f32 to vector<4x1xf32>
    %58 = arith.mulf %54, %57 : vector<4x1xf32>
    %59 = arith.mulf %56, %56 : vector<4x1xf32>
    %60 = arith.subf %58, %59 : vector<4x1xf32>
    %cst_25 = arith.constant 0.000000e+00 : f32
    %61 = vector.broadcast %cst_25 : f32 to vector<4x1xf32>
    %62 = arith.maximumf %60, %61 : vector<4x1xf32>
    %cst_26 = arith.constant 1.000000e-03 : f32
    %63 = vector.broadcast %cst_26 : f32 to vector<4x1xf32>
    %64 = arith.addf %62, %63 : vector<4x1xf32>
    %65 = math.rsqrt %64 : vector<4x1xf32>
    %66 = arith.mulf %65, %0 : vector<4x1xf32>
    %67 = vector.broadcast %56 : vector<4x1xf32> to vector<4x16xf32>
    %68 = arith.subf %49, %67 : vector<4x16xf32>
    %69 = vector.broadcast %66 : vector<4x1xf32> to vector<4x16xf32>
    %70 = arith.mulf %68, %69 : vector<4x16xf32>
    %71 = vector.broadcast %1 : vector<4x1xf32> to vector<4x16xf32>
    %72 = arith.addf %70, %71 : vector<4x16xf32>
    %cst_27 = arith.constant 0.000000e+00 : f32
    %73 = vector.broadcast %cst_27 : f32 to vector<4x16xf32>
    %74 = arith.maximumf %72, %73 : vector<4x16xf32>
    %cst_28 = arith.constant dense<0.000000e+00> : vector<8x16xf32>
    %75 = tpu.matmul %2, %74, %cst_28 {dimension_numbers = #tpu.dot_dimension_numbers<[1], [0], [0], [1], [0, 0, 1, 1], [], []>} : vector<8x4xf32>, vector<4x16xf32>, vector<8x16xf32> -> vector<8x16xf32>
    %cst_29 = arith.constant dense<0xFF800000> : vector<8xf32>
    %76 = vector.multi_reduction <maximumf>, %75, %cst_29 [1] : vector<8x16xf32> to vector<8xf32>
    %77 = vector.shape_cast %76 : vector<8xf32> to vector<8x1xf32>
    %78 = vector.broadcast %77 : vector<8x1xf32> to vector<8x16xf32>
    %79 = arith.subf %75, %78 : vector<8x16xf32>
    %80 = math.exp %79 : vector<8x16xf32>
    %cst_30 = arith.constant dense<0.000000e+00> : vector<8xf32>
    %81 = vector.multi_reduction <add>, %80, %cst_30 [1] : vector<8x16xf32> to vector<8xf32>
    %82 = vector.shape_cast %81 : vector<8xf32> to vector<8x1xf32>
    %cst_31 = arith.constant dense<0.000000e+00> : vector<8x4xf32>
    %83 = tpu.matmul %80, %49, %cst_31 {dimension_numbers = #tpu.dot_dimension_numbers<[1], [1], [0], [0], [0, 0, 1, 0], [], []>} : vector<8x16xf32>, vector<4x16xf32>, vector<8x4xf32> -> vector<8x4xf32>
    %84 = tpu.reciprocal %82 : vector<8x1xf32> -> vector<8x1xf32>
    %85 = vector.broadcast %84 : vector<8x1xf32> to vector<8x4xf32>
    %86 = arith.mulf %83, %85 : vector<8x4xf32>
    %87 = arith.index_cast %c1_i32 : i32 to index
    %c0_32 = arith.constant 0 : index
    %c0_33 = arith.constant 0 : index
    %88 = vector.load %arg5[%87, %c0_32, %c0_33] : memref<2x8x4xf32, #tpu.memory_space<vmem>>, vector<1x8x4xf32>
    %89 = vector.shape_cast %88 : vector<1x8x4xf32> to vector<8x4xf32>
    %90 = vector.shape_cast %86 : vector<8x4xf32> to vector<1x8x4xf32>
    tpu.vector_store %arg5[%87, %c0_32, %c0_33], %90 {strides = array<i32>} : memref<2x8x4xf32, #tpu.memory_space<vmem>>, vector<1x8x4xf32>,
    %c2_i32 = arith.constant 2 : i32
    return
  }
  func.func @transform_0(%arg0: i32) -> (i32, i32, i32) {
    %c0_i32 = arith.constant 0 : i32
    %c0_i32_0 = arith.constant 0 : i32
    %c0_i32_1 = arith.constant 0 : i32
    return %arg0, %c0_i32, %c0_i32_0 : i32, i32, i32
  }
  func.func @transform_1(%arg0: i32) -> (i32, i32) {
    %c0_i32 = arith.constant 0 : i32
    %c0_i32_0 = arith.constant 0 : i32
    %c0_i32_1 = arith.constant 0 : i32
    return %c0_i32, %c0_i32_0 : i32, i32
  }
  func.func @transform_2(%arg0: i32) -> (i32, i32) {
    %c0_i32 = arith.constant 0 : i32
    %c0_i32_0 = arith.constant 0 : i32
    %c0_i32_1 = arith.constant 0 : i32
    return %c0_i32, %c0_i32_0 : i32, i32
  }
  func.func @transform_3(%arg0: i32) -> (i32, i32) {
    %c0_i32 = arith.constant 0 : i32
    %c0_i32_0 = arith.constant 0 : i32
    %c0_i32_1 = arith.constant 0 : i32
    return %c0_i32, %c0_i32_0 : i32, i32
  }
  func.func @transform_4(%arg0: i32) -> (i32, i32, i32) {
    %c0_i32 = arith.constant 0 : i32
    %c0_i32_0 = arith.constant 0 : i32
    %c0_i32_1 = arith.constant 0 : i32
    return %arg0, %c0_i32, %c0_i32_0 : i32, i32, i32
  }
}

</mosaic_0001>

<llo_original>
// kernel: diff_pool_pallas.2
$region0: #{diff_pool_pallas.2}
  #allocation0 [shape = 'u32[]', space=smem, size = 0x4, offset = 0x4, fixed_abs, tag = 'smem constant byte address 0x4 - core index']
  #allocation1 [shape = 'u32[144,128]{1,0:T(1,128)}', space=vmem, size = 0x12000, scoped, tag = 'internal scratch']
  %s0 = inlined_call_operand.hbm [shape: f32[2,4,16], index: 0, kind: input, shape index: {}]
  %s1 = inlined_call_operand.vmem [shape: f32[4,1], index: 1, kind: output, shape index: {}]
  %s2 = sld [smem:[#allocation0]]
  $region22: #{diff_pool_pallas.2} parent=0
    _
  %s4 = ssub.s32 1, %s2
  %s5 = scalar_select 0, %s4, %s2
  $region1: #{diff_pool_pallas.2} parent=0
    #allocation2 [shape = 'u8[4096]{0}', space=vmem, size = 0x1000, scoped, tag = 'input window, operand 0, single buffered']
    #allocation3 [shape = 's32[1]{0}', space=sflag, size = 0x4, scoped, tag = 'scoped memory for diff_pool_pallas.2']
    %6 = vsyncpa [#allocation3], 0
    // Predicated region
    $region2: #{diff_pool_pallas.2} parent=1 // pred_check
      _
    $region3: #{diff_pool_pallas.2} parent=1 // pred_check_branch
      %8 = sbr.rel (0) target = $region5
    $region4: #{diff_pool_pallas.2} parent=1 // pred_region
      %s10 = ssub.s32 128, 128
      %11 = vsyncadd [#allocation3], %s10
      %s12 = sshll.u32 [#allocation2], 4
      %s13 = int_to_ptr.vmem [resolvable:$true] %s12
      %18 = dma.hbm_to_vmem [thread:$0]  %s0, 128, %s13, [#allocation3], 64, 64, 4
    $region5: #{diff_pool_pallas.2} parent=1 // pred_fallthru
      _
    // Predicated region
    $region6: #{diff_pool_pallas.2} parent=1 // pred_check
      _
    $region7: #{diff_pool_pallas.2} parent=1 // pred_check_branch
      %20 = sbr.rel (0) target = $region9
    $region8: #{diff_pool_pallas.2} parent=1 // pred_region
      %21 = dma.done [#allocation3], 128
    $region9: #{diff_pool_pallas.2} parent=1 // pred_fallthru
      _
    %p22 = scmp.eq.s32.totalorder 0, 0
    // Predicated region
    $region10: #{diff_pool_pallas.2} parent=1 // pred_check
      %p23 = pneg %p22
    $region11: #{diff_pool_pallas.2} parent=1 // pred_check_branch
      %25 = sbr.rel (%p23) target = $region13
    $region12: #{diff_pool_pallas.2} parent=1 // pred_region
      %vm26 = vcmask 3072
      %27 = vst.msk [vmem:[%s1] sm:$0xf] %vm26, 0.0
    $region13: #{diff_pool_pallas.2} parent=1 // pred_fallthru
      _
    %v28 = vld [vmem:[#allocation2] sm:$0xf]
    %vm29 = vcmask 125952
    %v30 = vsel %vm29, %v28, 0.0
    %31 = vadd.xlane.f32.xlu0 %v30
    %v32 = vpop.xlane.xlu0 %31
    %v33 = vmul.f32 %v28, %v28
    %v34 = vsel %vm29, %v33, 0.0
    %35 = vadd.xlane.f32.xlu0 %v34
    %v36 = vpop.xlane.xlu0 %35
    %v37 = vmul.f32 %v32, 0.0625
    %v38 = vmul.f32 %v36, 0.0625
    %v39 = vmul.f32 %v37, %v37
    %v40 = vsub.f32 %v38, %v39
    %v41 = vmax.f32 %v40, 0.0
    %v42 = vadd.f32 %v41, 0.001
    %v43 = vrcp.pop %v42
    %v44 = vmul.f32 %v41, %v43
    %v45 = vadd.f32 %v44, 0.0
    %s46 = scalar_lea.vmem [#allocation2], 4
    %v47 = vld [vmem:[%s46] sm:$0xf]
    %v48 = vsel %vm29, %v47, 0.0
    %49 = vadd.xlane.f32.xlu0 %v48
    %v50 = vpop.xlane.xlu0 %49
    %v51 = vmul.f32 %v47, %v47
    %v52 = vsel %vm29, %v51, 0.0
    %53 = vadd.xlane.f32.xlu0 %v52
    %v54 = vpop.xlane.xlu0 %53
    %v55 = vmul.f32 %v50, 0.0625
    %v56 = vmul.f32 %v54, 0.0625
    %v57 = vmul.f32 %v55, %v55
    %v58 = vsub.f32 %v56, %v57
    %v59 = vmax.f32 %v58, 0.0
    %v60 = vadd.f32 %v59, 0.001
    %v61 = vrcp.pop %v60
    %v62 = vmul.f32 %v59, %v61
    %v63 = vadd.f32 %v45, %v62
    %v64 = vld [vmem:[%s1] sm:$0xf]
    %v65 = vmul.f32 %v63, 0.5
    %v66 = vadd.f32 %v64, %v65
    %vm67 = vcmask 3072
    %68 = vst.msk [vmem:[%s1] sm:$0xf] %vm67, %v66
    // Predicated region
    $region14: #{diff_pool_pallas.2} parent=1 // pred_check
      _
    $region15: #{diff_pool_pallas.2} parent=1 // pred_check_branch
      %70 = sbr.rel (0) target = $region17
    $region16: #{diff_pool_pallas.2} parent=1 // pred_region
      _
    $region17: #{diff_pool_pallas.2} parent=1 // pred_fallthru
      _
    // Predicated region
    $region18: #{diff_pool_pallas.2} parent=1 // pred_check
      _
    $region19: #{diff_pool_pallas.2} parent=1 // pred_check_branch
      %72 = sbr.rel (0) target = $region21
    $region20: #{diff_pool_pallas.2} parent=1 // pred_region
      _
    $region21: #{diff_pool_pallas.2} parent=1 // pred_fallthru
      _
    %73 = vsyncpa [#allocation3], 1

// kernel: diff_pool_pallas.3
$region0: #{diff_pool_pallas.3}
  #allocation0 [shape = 'u32[]', space=smem, size = 0x4, offset = 0x4, fixed_abs, tag = 'smem constant byte address 0x4 - core index']
  #allocation1 [shape = 'u32[144,128]{1,0:T(1,128)}', space=vmem, size = 0x12000, scoped, tag = 'internal scratch']
  %s0 = inlined_call_operand.vmem [shape: f32[2,4,16], index: 0, kind: input, shape index: {}]
  %s1 = inlined_call_operand.vmem [shape: f32[4,1], index: 1, kind: input, shape index: {}]
  %s2 = inlined_call_operand.vmem [shape: f32[4,1], index: 2, kind: input, shape index: {}]
  %s3 = inlined_call_operand.vmem [shape: f32[8,4], index: 3, kind: input, shape index: {}]
  %s4 = inlined_call_operand.vmem [shape: f32[2,8,4], index: 4, kind: output, shape index: {}]
  %s5 = sld [smem:[#allocation0]]
  $region26: #{diff_pool_pallas.3} parent=0
    _
  %s7 = ssub.s32 1, %s5
  %s8 = scalar_select 0, %s7, %s5
  // Predicated region
  $region2: #{diff_pool_pallas.3} parent=0 // pred_check
    _
  $region3: #{diff_pool_pallas.3} parent=0 // pred_check_branch
    %10 = sbr.rel (0) target = $region5
  $region4: #{diff_pool_pallas.3} parent=0 // pred_region
    _
  $region5: #{diff_pool_pallas.3} parent=0 // pred_fallthru
    _
  // Predicated region
  $region6: #{diff_pool_pallas.3} parent=0 // pred_check
    _
  $region7: #{diff_pool_pallas.3} parent=0 // pred_check_branch
    %12 = sbr.rel (0) target = $region9
  $region8: #{diff_pool_pallas.3} parent=0 // pred_region
    _
  $region9: #{diff_pool_pallas.3} parent=0 // pred_fallthru
    _
  // Predicated region
  $region10: #{diff_pool_pallas.3} parent=0 // pred_check
    _
  $region11: #{diff_pool_pallas.3} parent=0 // pred_check_branch
    %14 = sbr.rel (0) target = $region13
  $region12: #{diff_pool_pallas.3} parent=0 // pred_region
    _
  $region13: #{diff_pool_pallas.3} parent=0 // pred_fallthru
    _
  // Predicated region
  $region14: #{diff_pool_pallas.3} parent=0 // pred_check
    _
  $region15: #{diff_pool_pallas.3} parent=0 // pred_check_branch
    %16 = sbr.rel (0) target = $region17
  $region16: #{diff_pool_pallas.3} parent=0 // pred_region
    _
  $region17: #{diff_pool_pallas.3} parent=0 // pred_fallthru
    _
  %v17 = vld [vmem:[%s1] sm:$0xf]
  %v18 = vld [vmem:[%s2] sm:$0xf]
  %v19 = vld [vmem:[%s3] sm:$0xff]
  %v20 = vld [vmem:[%s0] sm:$0xf]
  %vm21 = vcmask 125952
  %v22 = vsel %vm21, %v20, 0.0
  %23 = vadd.xlane.f32.xlu0 %v22
  %v24 = vpop.xlane.xlu0 %23
  %v25 = vmul.f32 %v20, %v20
  %v26 = vsel %vm21, %v25, 0.0
  %27 = vadd.xlane.f32.xlu0 %v26
  %v28 = vpop.xlane.xlu0 %27
  %v29 = vmul.f32 %v24, 0.0625
  %v30 = vmul.f32 %v28, 0.0625
  %v31 = vmul.f32 %v29, %v29
  %v32 = vsub.f32 %v30, %v31
  %v33 = vmax.f32 %v32, 0.0
  %v34 = vadd.f32 %v33, 0.001
  %v35 = vrsqrt.pop %v34
  %v36 = vmul.f32 %v35, %v17
  %v37 = vsub.f32 %v20, %v29
  %39 = vset.pattern.permute.xlu0 0
  %40 = vperm.xlu0 %39, %v36
  %v41 = vpop.permute.xlu0 %40
  %v43 = vmul.f32 %v37, %v41
  %45 = vset.pattern.permute.xlu0 0
  %46 = vperm.xlu0 %45, %v18
  %v47 = vpop.permute.xlu0 %46
  %v49 = vadd.f32 %v43, %v47
  %v50 = vmax.f32 %v49, 0.0
  %vm51 = vcmask 31744
  %v53 = vsel %vm51, %v19, 0
  %vm55 = vcmask 1043456
  %v57 = vsel %vm55, %v50, 0
  %59 = vmatprep.subr.mxu0 0.0
  %60 = vmatpush1.msra.mxu0 0.0
  %61 = vmatprep.subr.mxu0 0.0
  %62 = vmatpush1.msra.mxu0 0.0
  %63 = vmatprep.subr.mxu0 0.0
  %64 = vmatpush1.msra.mxu0 0.0
  %65 = vmatprep.subr.mxu0 0.0
  %66 = vmatpush1.msra.mxu0 0.0
  %67 = vmatprep.subr.mxu0 0.0
  %68 = vmatpush1.msra.mxu0 0.0
  %69 = vmatprep.subr.mxu0 0.0
  %70 = vmatpush1.msra.mxu0 0.0
  %71 = vmatprep.subr.mxu0 0.0
  %72 = vmatpush1.msra.mxu0 0.0
  %73 = vmatprep.subr.mxu0 0.0
  %74 = vmatpush1.msra.mxu0 0.0
  %75 = vmatprep.subr.mxu0 0.0
  %76 = vmatpush1.msra.mxu0 0.0
  %77 = vmatprep.subr.mxu0 0.0
  %78 = vmatpush1.msra.mxu0 0.0
  %79 = vmatprep.subr.mxu0 0.0
  %80 = vmatpush1.msra.mxu0 0.0
  %81 = vmatprep.subr.mxu0 0.0
  %82 = vmatpush1.msra.mxu0 0.0
  %83 = vmatprep.subr.mxu0 0.0
  %84 = vmatpush1.msra.mxu0 0.0
  %85 = vmatprep.subr.mxu0 0.0
  %86 = vmatpush1.msra.mxu0 0.0
  %87 = vmatprep.subr.mxu0 0.0
  %88 = vmatpush1.msra.mxu0 0.0
  %89 = vmatprep.subr.mxu0 0.0
  %90 = vmatpush1.msra.mxu0 %v57
  %91 = vmatprep.subr.mxu0 0.0
  %92 = vmatpush2.msra.mxu0 0.0
  %93 = vmatprep.subr.mxu0 0.0
  %94 = vmatpush2.msra.mxu0 0.0
  %95 = vmatprep.subr.mxu0 0.0
  %96 = vmatpush2.msra.mxu0 0.0
  %97 = vmatprep.subr.mxu0 0.0
  %98 = vmatpush2.msra.mxu0 0.0
  %99 = vmatprep.subr.mxu0 0.0
  %100 = vmatpush2.msra.mxu0 0.0
  %101 = vmatprep.subr.mxu0 0.0
  %102 = vmatpush2.msra.mxu0 0.0
  %103 = vmatprep.subr.mxu0 0.0
  %104 = vmatpush2.msra.mxu0 0.0
  %105 = vmatprep.subr.mxu0 0.0
  %106 = vmatpush2.msra.mxu0 0.0
  %107 = vmatprep.subr.mxu0 0.0
  %108 = vmatpush2.msra.mxu0 0.0
  %109 = vmatprep.subr.mxu0 0.0
  %110 = vmatpush2.msra.mxu0 0.0
  %111 = vmatprep.subr.mxu0 0.0
  %112 = vmatpush2.msra.mxu0 0.0
  %113 = vmatprep.subr.mxu0 0.0
  %114 = vmatpush2.msra.mxu0 0.0
  %115 = vmatprep.subr.mxu0 0.0
  %116 = vmatpush2.msra.mxu0 0.0
  %117 = vmatprep.subr.mxu0 0.0
  %118 = vmatpush2.msra.mxu0 0.0
  %119 = vmatprep.subr.mxu0 0.0
  %120 = vmatpush2.msra.mxu0 0.0
  %121 = vmatprep.subr.mxu0 0.0
  %122 = vmatpush2.msra.mxu0 0.0
  %123 = vmatprep.mubr.f32.mxu0 0.0
  %124 = vmatmul.mubr.f32.gmra.mxu0 %v53
  %v125 = vpop.f32.mrf.mxu0
  %v126 = vadd.f32 0.0, %v125
  %v127 = vpop.f32.mrf.mxu0
  %128 = vdwg.mxu0
  %vm129 = vcmask 130048
  %v130 = vsel %vm129, %v126, -inf
  %131 = vmax.xlane.f32.xlu0 %v130
  %v132 = vpop.xlane.xlu0 %131
  %v133 = vsub.f32 %v126, %v132
  %v134 = vmul.f32 %v133, 1.442695
  %v135 = vpow.pop %v134
  %v136 = vsel %vm129, %v135, 0.0
  %137 = vadd.xlane.f32.xlu0 %v136
  %v138 = vpop.xlane.xlu0 %137
  %v140 = vsel %vm129, %v135, 0
  %v143 = vsel %vm129, %v20, 0
  %145 = vmatprep.subr.mxu0 0.0
  %146 = vmatpush1.xpose.msra.mxu0 0.0
  %147 = vmatprep.subr.mxu0 0.0
  %148 = vmatpush1.xpose.msra.mxu0 0.0
  %149 = vmatprep.subr.mxu0 0.0
  %150 = vmatpush1.xpose.msra.mxu0 0.0
  %151 = vmatprep.subr.mxu0 0.0
  %152 = vmatpush1.xpose.msra.mxu0 0.0
  %153 = vmatprep.subr.mxu0 0.0
  %154 = vmatpush1.xpose.msra.mxu0 0.0
  %155 = vmatprep.subr.mxu0 0.0
  %156 = vmatpush1.xpose.msra.mxu0 0.0
  %157 = vmatprep.subr.mxu0 0.0
  %158 = vmatpush1.xpose.msra.mxu0 0.0
  %159 = vmatprep.subr.mxu0 0.0
  %160 = vmatpush1.xpose.msra.mxu0 0.0
  %161 = vmatprep.subr.mxu0 0.0
  %162 = vmatpush1.xpose.msra.mxu0 0.0
  %163 = vmatprep.subr.mxu0 0.0
  %164 = vmatpush1.xpose.msra.mxu0 0.0
  %165 = vmatprep.subr.mxu0 0.0
  %166 = vmatpush1.xpose.msra.mxu0 0.0
  %167 = vmatprep.subr.mxu0 0.0
  %168 = vmatpush1.xpose.msra.mxu0 0.0
  %169 = vmatprep.subr.mxu0 0.0
  %170 = vmatpush1.xpose.msra.mxu0 0.0
  %171 = vmatprep.subr.mxu0 0.0
  %172 = vmatpush1.xpose.msra.mxu0 0.0
  %173 = vmatprep.subr.mxu0 0.0
  %174 = vmatpush1.xpose.msra.mxu0 0.0
  %175 = vmatprep.subr.mxu0 0.0
  %176 = vmatpush1.xpose.msra.mxu0 %v143
  %177 = vmatprep.subr.mxu0 0.0
  %178 = vmatpush2.xpose.msra.mxu0 0.0
  %179 = vmatprep.subr.mxu0 0.0
  %180 = vmatpush2.xpose.msra.mxu0 0.0
  %181 = vmatprep.subr.mxu0 0.0
  %182 = vmatpush2.xpose.msra.mxu0 0.0
  %183 = vmatprep.subr.mxu0 0.0
  %184 = vmatpush2.xpose.msra.mxu0 0.0
  %185 = vmatprep.subr.mxu0 0.0
  %186 = vmatpush2.xpose.msra.mxu0 0.0
  %187 = vmatprep.subr.mxu0 0.0
  %188 = vmatpush2.xpose.msra.mxu0 0.0
  %189 = vmatprep.subr.mxu0 0.0
  %190 = vmatpush2.xpose.msra.mxu0 0.0
  %191 = vmatprep.subr.mxu0 0.0
  %192 = vmatpush2.xpose.msra.mxu0 0.0
  %193 = vmatprep.subr.mxu0 0.0
  %194 = vmatpush2.xpose.msra.mxu0 0.0
  %195 = vmatprep.subr.mxu0 0.0
  %196 = vmatpush2.xpose.msra.mxu0 0.0
  %197 = vmatprep.subr.mxu0 0.0
  %198 = vmatpush2.xpose.msra.mxu0 0.0
  %199 = vmatprep.subr.mxu0 0.0
  %200 = vmatpush2.xpose.msra.mxu0 0.0
  %201 = vmatprep.subr.mxu0 0.0
  %202 = vmatpush2.xpose.msra.mxu0 0.0
  %203 = vmatprep.subr.mxu0 0.0
  %204 = vmatpush2.xpose.msra.mxu0 0.0
  %205 = vmatprep.subr.mxu0 0.0
  %206 = vmatpush2.xpose.msra.mxu0 0.0
  %207 = vmatprep.subr.mxu0 0.0
  %208 = vmatpush2.xpose.msra.mxu0 0.0
  %209 = vmatprep.mubr.f32.mxu0 0.0
  %210 = vmatmul.mubr.f32.gmra.mxu0 %v140
  %v211 = vpop.f32.mrf.mxu0
  %v212 = vadd.f32 0.0, %v211
  %v213 = vpop.f32.mrf.mxu0
  %214 = vdwg.mxu0
  %v215 = vrcp.pop %v138
  %v216 = vmul.f32 %v212, %v215
  %217 = vst.msk [vmem:[%s4] sm:$0xff] %vm51, %v216
  %s218 = scalar_lea.vmem %s0, 4
  %v219 = vld [vmem:[%s218] sm:$0xf]
  %v220 = vsel %vm21, %v219, 0.0
  %221 = vadd.xlane.f32.xlu0 %v220
  %v222 = vpop.xlane.xlu0 %221
  %v223 = vmul.f32 %v219, %v219
  %v224 = vsel %vm21, %v223, 0.0
  %225 = vadd.xlane.f32.xlu0 %v224
  %v226 = vpop.xlane.xlu0 %225
  %v227 = vmul.f32 %v222, 0.0625
  %v228 = vmul.f32 %v226, 0.0625
  %v229 = vmul.f32 %v227, %v227
  %v230 = vsub.f32 %v228, %v229
  %v231 = vmax.f32 %v230, 0.0
  %v232 = vadd.f32 %v231, 0.001
  %v233 = vrsqrt.pop %v232
  %v234 = vmul.f32 %v233, %v17
  %v235 = vsub.f32 %v219, %v227
  %237 = vset.pattern.permute.xlu0 0
  %238 = vperm.xlu0 %237, %v234
  %v239 = vpop.permute.xlu0 %238
  %v241 = vmul.f32 %v235, %v239
  %v242 = vadd.f32 %v241, %v47
  %v243 = vmax.f32 %v242, 0.0
  %v245 = vsel %vm55, %v243, 0
  %247 = vmatprep.subr.mxu0 0.0
  %248 = vmatpush1.msra.mxu0 0.0
  %249 = vmatprep.subr.mxu0 0.0
  %250 = vmatpush1.msra.mxu0 0.0
  %251 = vmatprep.subr.mxu0 0.0
  %252 = vmatpush1.msra.mxu0 0.0
  %253 = vmatprep.subr.mxu0 0.0
  %254 = vmatpush1.msra.mxu0 0.0
  %255 = vmatprep.subr.mxu0 0.0
  %256 = vmatpush1.msra.mxu0 0.0
  %257 = vmatprep.subr.mxu0 0.0
  %258 = vmatpush1.msra.mxu0 0.0
  %259 = vmatprep.subr.mxu0 0.0
  %260 = vmatpush1.msra.mxu0 0.0
  %261 = vmatprep.subr.mxu0 0.0
  %262 = vmatpush1.msra.mxu0 0.0
  %263 = vmatprep.subr.mxu0 0.0
  %264 = vmatpush1.msra.mxu0 0.0
  %265 = vmatprep.subr.mxu0 0.0
  %266 = vmatpush1.msra.mxu0 0.0
  %267 = vmatprep.subr.mxu0 0.0
  %268 = vmatpush1.msra.mxu0 0.0
  %269 = vmatprep.subr.mxu0 0.0
  %270 = vmatpush1.msra.mxu0 0.0
  %271 = vmatprep.subr.mxu0 0.0
  %272 = vmatpush1.msra.mxu0 0.0
  %273 = vmatprep.subr.mxu0 0.0
  %274 = vmatpush1.msra.mxu0 0.0
  %275 = vmatprep.subr.mxu0 0.0
  %276 = vmatpush1.msra.mxu0 0.0
  %277 = vmatprep.subr.mxu0 0.0
  %278 = vmatpush1.msra.mxu0 %v245
  %279 = vmatprep.subr.mxu0 0.0
  %280 = vmatpush2.msra.mxu0 0.0
  %281 = vmatprep.subr.mxu0 0.0
  %282 = vmatpush2.msra.mxu0 0.0
  %283 = vmatprep.subr.mxu0 0.0
  %284 = vmatpush2.msra.mxu0 0.0
  %285 = vmatprep.subr.mxu0 0.0
  %286 = vmatpush2.msra.mxu0 0.0
  %287 = vmatprep.subr.mxu0 0.0
  %288 = vmatpush2.msra.mxu0 0.0
  %289 = vmatprep.subr.mxu0 0.0
  %290 = vmatpush2.msra.mxu0 0.0
  %291 = vmatprep.subr.mxu0 0.0
  %292 = vmatpush2.msra.mxu0 0.0
  %293 = vmatprep.subr.mxu0 0.0
  %294 = vmatpush2.msra.mxu0 0.0
  %295 = vmatprep.subr.mxu0 0.0
  %296 = vmatpush2.msra.mxu0 0.0
  %297 = vmatprep.subr.mxu0 0.0
  %298 = vmatpush2.msra.mxu0 0.0
  %299 = vmatprep.subr.mxu0 0.0
  %300 = vmatpush2.msra.mxu0 0.0
  %301 = vmatprep.subr.mxu0 0.0
  %302 = vmatpush2.msra.mxu0 0.0
  %303 = vmatprep.subr.mxu0 0.0
  %304 = vmatpush2.msra.mxu0 0.0
  %305 = vmatprep.subr.mxu0 0.0
  %306 = vmatpush2.msra.mxu0 0.0
  %307 = vmatprep.subr.mxu0 0.0
  %308 = vmatpush2.msra.mxu0 0.0
  %309 = vmatprep.subr.mxu0 0.0
  %310 = vmatpush2.msra.mxu0 0.0
  %311 = vmatprep.mubr.f32.mxu0 0.0
  %312 = vmatmul.mubr.f32.gmra.mxu0 %v53
  %v313 = vpop.f32.mrf.mxu0
  %v314 = vadd.f32 0.0, %v313
  %v315 = vpop.f32.mrf.mxu0
  %316 = vdwg.mxu0
  %v317 = vsel %vm129, %v314, -inf
  %318 = vmax.xlane.f32.xlu0 %v317
  %v319 = vpop.xlane.xlu0 %318
  %v320 = vsub.f32 %v314, %v319
  %v321 = vmul.f32 %v320, 1.442695
  %v322 = vpow.pop %v321
  %v323 = vsel %vm129, %v322, 0.0
  %324 = vadd.xlane.f32.xlu0 %v323
  %v325 = vpop.xlane.xlu0 %324
  %v327 = vsel %vm129, %v322, 0
  %v330 = vsel %vm129, %v219, 0
  %332 = vmatprep.subr.mxu0 0.0
  %333 = vmatpush1.xpose.msra.mxu0 0.0
  %334 = vmatprep.subr.mxu0 0.0
  %335 = vmatpush1.xpose.msra.mxu0 0.0
  %336 = vmatprep.subr.mxu0 0.0
  %337 = vmatpush1.xpose.msra.mxu0 0.0
  %338 = vmatprep.subr.mxu0 0.0
  %339 = vmatpush1.xpose.msra.mxu0 0.0
  %340 = vmatprep.subr.mxu0 0.0
  %341 = vmatpush1.xpose.msra.mxu0 0.0
  %342 = vmatprep.subr.mxu0 0.0
  %343 = vmatpush1.xpose.msra.mxu0 0.0
  %344 = vmatprep.subr.mxu0 0.0
  %345 = vmatpush1.xpose.msra.mxu0 0.0
  %346 = vmatprep.subr.mxu0 0.0
  %347 = vmatpush1.xpose.msra.mxu0 0.0
  %348 = vmatprep.subr.mxu0 0.0
  %349 = vmatpush1.xpose.msra.mxu0 0.0
  %350 = vmatprep.subr.mxu0 0.0
  %351 = vmatpush1.xpose.msra.mxu0 0.0
  %352 = vmatprep.subr.mxu0 0.0
  %353 = vmatpush1.xpose.msra.mxu0 0.0
  %354 = vmatprep.subr.mxu0 0.0
  %355 = vmatpush1.xpose.msra.mxu0 0.0
  %356 = vmatprep.subr.mxu0 0.0
  %357 = vmatpush1.xpose.msra.mxu0 0.0
  %358 = vmatprep.subr.mxu0 0.0
  %359 = vmatpush1.xpose.msra.mxu0 0.0
  %360 = vmatprep.subr.mxu0 0.0
  %361 = vmatpush1.xpose.msra.mxu0 0.0
  %362 = vmatprep.subr.mxu0 0.0
  %363 = vmatpush1.xpose.msra.mxu0 %v330
  %364 = vmatprep.subr.mxu0 0.0
  %365 = vmatpush2.xpose.msra.mxu0 0.0
  %366 = vmatprep.subr.mxu0 0.0
  %367 = vmatpush2.xpose.msra.mxu0 0.0
  %368 = vmatprep.subr.mxu0 0.0
  %369 = vmatpush2.xpose.msra.mxu0 0.0
  %370 = vmatprep.subr.mxu0 0.0
  %371 = vmatpush2.xpose.msra.mxu0 0.0
  %372 = vmatprep.subr.mxu0 0.0
  %373 = vmatpush2.xpose.msra.mxu0 0.0
  %374 = vmatprep.subr.mxu0 0.0
  %375 = vmatpush2.xpose.msra.mxu0 0.0
  %376 = vmatprep.subr.mxu0 0.0
  %377 = vmatpush2.xpose.msra.mxu0 0.0
  %378 = vmatprep.subr.mxu0 0.0
  %379 = vmatpush2.xpose.msra.mxu0 0.0
  %380 = vmatprep.subr.mxu0 0.0
  %381 = vmatpush2.xpose.msra.mxu0 0.0
  %382 = vmatprep.subr.mxu0 0.0
  %383 = vmatpush2.xpose.msra.mxu0 0.0
  %384 = vmatprep.subr.mxu0 0.0
  %385 = vmatpush2.xpose.msra.mxu0 0.0
  %386 = vmatprep.subr.mxu0 0.0
  %387 = vmatpush2.xpose.msra.mxu0 0.0
  %388 = vmatprep.subr.mxu0 0.0
  %389 = vmatpush2.xpose.msra.mxu0 0.0
  %390 = vmatprep.subr.mxu0 0.0
  %391 = vmatpush2.xpose.msra.mxu0 0.0
  %392 = vmatprep.subr.mxu0 0.0
  %393 = vmatpush2.xpose.msra.mxu0 0.0
  %394 = vmatprep.subr.mxu0 0.0
  %395 = vmatpush2.xpose.msra.mxu0 0.0
  %396 = vmatprep.mubr.f32.mxu0 0.0
  %397 = vmatmul.mubr.f32.gmra.mxu0 %v327
  %v398 = vpop.f32.mrf.mxu0
  %v399 = vadd.f32 0.0, %v398
  %v400 = vpop.f32.mrf.mxu0
  %401 = vdwg.mxu0
  %v402 = vrcp.pop %v325
  %v403 = vmul.f32 %v399, %v402
  %s404 = scalar_lea.vmem %s4, 8
  %405 = vst.msk [vmem:[%s404] sm:$0xff] %vm51, %v403
  // Predicated region
  $region18: #{diff_pool_pallas.3} parent=0 // pred_check
    _
  $region19: #{diff_pool_pallas.3} parent=0 // pred_check_branch
    %407 = sbr.rel (0) target = $region21
  $region20: #{diff_pool_pallas.3} parent=0 // pred_region
    _
  $region21: #{diff_pool_pallas.3} parent=0 // pred_fallthru
    _
  // Predicated region
  $region22: #{diff_pool_pallas.3} parent=0 // pred_check
    _
  $region23: #{diff_pool_pallas.3} parent=0 // pred_check_branch
    %409 = sbr.rel (0) target = $region25
  $region24: #{diff_pool_pallas.3} parent=0 // pred_region
    _
  $region25: #{diff_pool_pallas.3} parent=0 // pred_fallthru
    _

</llo_original>
